<compile_context>
chip_gen: v6e
topology: v6e:2x2x1
jax: 0.10.0
libtpu: 0.0.40
codegen_flags: <defaults>
</compile_context>

<pallas_src>
import functools

import jax
import jax.numpy as jnp
from jax.experimental import pallas as pl
from jax.experimental.pallas import tpu as pltpu

BN_EPS = 1e-5


def deepset_kernel(x_ref,
                   pw1_ref, pb1_ref, pw2_ref, pb2_ref, pw3_ref, pb3_ref,
                   rw1_ref, rb1_ref, rw2_ref, rb2_ref, rw3_ref, rb3_ref,
                   out_ref, *, tb, set_size):
    f32 = jnp.float32
    bf16 = jnp.bfloat16

    # f32 x tile -> bf16 for the MXU (in-kernel cast = free VPU filler, no extra HBM pass).
    x = x_ref[...].astype(bf16)

    # ---- phi MLP on (TB*N, D) rows: bf16 MXU matmuls, f32 accumulate, f32 bias/ReLU.
    h = jnp.dot(x, pw1_ref[...], preferred_element_type=f32) + pb1_ref[...]
    h = jnp.maximum(h, 0.0)
    h = jnp.dot(h.astype(bf16), pw2_ref[...], preferred_element_type=f32) + pb2_ref[...]
    h = jnp.maximum(h, 0.0)
    h = jnp.dot(h.astype(bf16), pw3_ref[...], preferred_element_type=f32) + pb3_ref[...]
    h = jnp.maximum(h, 0.0)                                  # (TB*N, phi_hidden) f32

    # ---- mean-pool over the set axis: sublane reduce (no MXU) + exact f32 1/N scale.
    ph = h.shape[-1]
    pooled = jnp.sum(h.reshape(tb, set_size, ph), axis=1) * jnp.float32(1.0 / set_size)

    # ---- rho MLP (eval-mode BatchNorm already folded into rw/rb in the wrapper).
    r = jnp.dot(pooled.astype(bf16), rw1_ref[...], preferred_element_type=f32) + rb1_ref[...]
    r = jnp.maximum(r, 0.0)
    r = jnp.dot(r.astype(bf16), rw2_ref[...], preferred_element_type=f32) + rb2_ref[...]
    r = jnp.maximum(r, 0.0)
    out = jnp.dot(r.astype(bf16), rw3_ref[...], preferred_element_type=f32) + rb3_ref[...]

    # (TB, out_cols) per-set outputs; out_cols = round_up(output_dim, 8), so writeback is
    # ~32 B/set instead of 512 B/set of a 128-lane f32 pad.
    out_ref[...] = out[None].astype(out_ref.dtype)


def _fold_bn(w, b, gamma, beta, mean, var, eps=BN_EPS):
    """Fold eval-mode BatchNorm1d into the preceding linear: y = x@W' + b'."""
    scale = gamma * jax.lax.rsqrt(var + eps)                 # (1, C)
    return w * scale, (b - mean) * scale + beta


def _round_up(v, m):
    return ((v + m - 1) // m) * m


def deepset_forward(x, params, *, tb=512):
    if x.ndim == 2:                                          # mirror torch's unsqueeze(0)
        x = x[None]
    B, N, D = x.shape
    output_dim = params["rw3"].shape[1]
    bf16 = jnp.bfloat16

    # --- fold eval-mode BatchNorm into the rho linear layers (wrapper, once) ---
    rw1, rb1 = _fold_bn(params["rw1"], params["rb1"],
                        params["g1"], params["be1"], params["m1"], params["v1"])
    rw2, rb2 = _fold_bn(params["rw2"], params["rb2"],
                        params["g2"], params["be2"], params["m2"], params["v2"])

    # --- pad the final linear only to a sublane-friendly column count (not 128 lanes) ---
    out_cols = max(8, _round_up(output_dim, 8))
    rw3 = jnp.pad(params["rw3"], ((0, 0), (0, out_cols - output_dim)))
    rb3 = jnp.pad(params["rb3"], ((0, 0), (0, out_cols - output_dim)))

    # --- batch-tile geometry: multiple of 8 sublanes; cap at ~ceil(B/2) so there are
    #     at least two grid steps whenever B allows it (feeds both v7x TensorCores) ---
    assert tb % 8 == 0, "tb must be a multiple of 8"
    tb = min(tb, max(8, _round_up(pl.cdiv(B, 2), 8)))
    num_tiles = pl.cdiv(B, tb)
    b_pad = num_tiles * tb
    tr = tb * N                                              # rows of flattened x per step

    xf = x.reshape(B * N, D)                                 # stays f32; cast happens in-kernel
    if b_pad != B:
        xf = jnp.pad(xf, ((0, (b_pad - B) * N), (0, 0)))

    w_args = (params["pw1"].astype(bf16), params["pb1"],
              params["pw2"].astype(bf16), params["pb2"],
              params["pw3"].astype(bf16), params["pb3"],
              rw1.astype(bf16), rb1,
              rw2.astype(bf16), rb2,
              rw3.astype(bf16), rb3)

    def const_spec(a):                                       # VMEM-resident across grid steps
        return pl.BlockSpec(a.shape, lambda i: (0, 0))

    in_specs = ([pl.BlockSpec((tr, D), lambda i: (i, 0))]    # x tile: pipelined over the grid
                + [const_spec(a) for a in w_args])           # weights/biases: resident

    # --- per-step VMEM budget: double-buffered x/out + f32/bf16 intermediates + headroom ---
    ph2 = params["pw1"].shape[1]                             # widest intermediate (2*phi_hidden)
    vmem_bytes = int(2 * tr * D * 4 + 8 * tr * ph2 * 4
                     + 2 * tb * out_cols * 4 + 4 * (1 << 20))
    vmem_bytes = min(max(vmem_bytes, 16 * (1 << 20)), 56 * (1 << 20))  # v7x-safe cap

    kernel = functools.partial(deepset_kernel, tb=tb, set_size=N)
    out = pl.pallas_call(
        kernel,
        out_shape=jax.ShapeDtypeStruct((num_tiles, tb, out_cols), jnp.float32),
        grid=(num_tiles,),
        in_specs=in_specs,
        out_specs=pl.BlockSpec((1, tb, out_cols), lambda i: (i, 0, 0)),
        compiler_params=pltpu.CompilerParams(
            dimension_semantics=("parallel",),
            vmem_limit_bytes=vmem_bytes),
    )(xf, *w_args)

    return out.reshape(b_pad, out_cols)[:B, :output_dim]


def init_params(key, input_dim=10, phi_hidden=32, rho_hidden=32, output_dim=1):
    def linear(k, fan_in, fan_out):
        kw, kb = jax.random.split(k)
        bound = 1.0 / float(fan_in) ** 0.5
        w = jax.random.uniform(kw, (fan_in, fan_out), jnp.float32, -bound, bound)
        b = jax.random.uniform(kb, (1, fan_out), jnp.float32, -bound, bound)
        return w, b

    keys = jax.random.split(key, 6)
    p = {}
    p["pw1"], p["pb1"] = linear(keys[0], input_dim, 2 * phi_hidden)
    p["pw2"], p["pb2"] = linear(keys[1], 2 * phi_hidden, phi_hidden)
    p["pw3"], p["pb3"] = linear(keys[2], phi_hidden, phi_hidden)
    p["rw1"], p["rb1"] = linear(keys[3], phi_hidden, 2 * rho_hidden)
    p["rw2"], p["rb2"] = linear(keys[4], 2 * rho_hidden, rho_hidden)
    p["rw3"], p["rb3"] = linear(keys[5], rho_hidden, output_dim)
    # BatchNorm1d params: fresh-module PyTorch defaults (gamma=1, beta=0, mean=0, var=1)
    p["g1"] = jnp.ones((1, 2 * rho_hidden), jnp.float32)
    p["be1"] = jnp.zeros((1, 2 * rho_hidden), jnp.float32)
    p["m1"] = jnp.zeros((1, 2 * rho_hidden), jnp.float32)
    p["v1"] = jnp.ones((1, 2 * rho_hidden), jnp.float32)
    p["g2"] = jnp.ones((1, rho_hidden), jnp.float32)
    p["be2"] = jnp.zeros((1, rho_hidden), jnp.float32)
    p["m2"] = jnp.zeros((1, rho_hidden), jnp.float32)
    p["v2"] = jnp.ones((1, rho_hidden), jnp.float32)
    return p


def reference_forward(x, p):
    """Pure-f32 eval-mode reference (unfused BN, mean pooling) = PyTorch semantics."""
    if x.ndim == 2:
        x = x[None]
    relu = lambda t: jnp.maximum(t, 0.0)
    h = relu(x @ p["pw1"] + p["pb1"])
    h = relu(h @ p["pw2"] + p["pb2"])
    h = relu(h @ p["pw3"] + p["pb3"])
    pooled = h.mean(axis=1)
    r = pooled @ p["rw1"] + p["rb1"]
    r = relu((r - p["m1"]) * jax.lax.rsqrt(p["v1"] + BN_EPS) * p["g1"] + p["be1"])
    r = r @ p["rw2"] + p["rb2"]
    r = relu((r - p["m2"]) * jax.lax.rsqrt(p["v2"] + BN_EPS) * p["g2"] + p["be2"])
    return r @ p["rw3"] + p["rb3"]


if __name__ == "__main__":
    key = jax.random.PRNGKey(0)
    k_x, k_p, k_x2 = jax.random.split(key, 3)

    input_dim, phi_hidden, rho_hidden, output_dim = 10, 32, 32, 1
    params = init_params(k_p, input_dim, phi_hidden, rho_hidden, output_dim)

    # small shape matching the module convention (batch, N, input_dim)
    B, N = 2, 8
    x = jax.random.normal(k_x, (B, N, input_dim), jnp.float32)
    out = jax.block_until_ready(deepset_forward(x, params))
    ref = reference_forward(x, params)
    assert out.shape == (B, output_dim), out.shape
    # bf16 matmul inputs (f32 accumulation) vs. pure-f32 reference -> loose tol
    assert jnp.allclose(out, ref, atol=5e-2, rtol=5e-2), (out, ref)

    # multi-tile check: exercises the batch grid (3 steps of TB=16 sets)
    B2 = 40
    x2 = jax.random.normal(k_x2, (B2, N, input_dim), jnp.float32)
    out2 = jax.block_until_ready(deepset_forward(x2, params, tb=16))
    ref2 = reference_forward(x2, params)
    assert out2.shape == (B2, output_dim), out2.shape
    assert jnp.allclose(out2, ref2, atol=5e-2, rtol=5e-2), (out2, ref2)

    print("KERNEL_OK")
</pallas_src>

<mosaic_0001>
module attributes {stable_mosaic.version = 11 : i64} {
  func.func @deepset_kernel(%arg0: i32, %arg1: memref<64x10xf32, #tpu.memory_space<vmem>>, %arg2: memref<10x64xbf16, #tpu.memory_space<vmem>>, %arg3: memref<1x64xf32, #tpu.memory_space<vmem>>, %arg4: memref<64x32xbf16, #tpu.memory_space<vmem>>, %arg5: memref<1x32xf32, #tpu.memory_space<vmem>>, %arg6: memref<32x32xbf16, #tpu.memory_space<vmem>>, %arg7: memref<1x32xf32, #tpu.memory_space<vmem>>, %arg8: memref<32x64xbf16, #tpu.memory_space<vmem>>, %arg9: memref<1x64xf32, #tpu.memory_space<vmem>>, %arg10: memref<64x32xbf16, #tpu.memory_space<vmem>>, %arg11: memref<1x32xf32, #tpu.memory_space<vmem>>, %arg12: memref<32x8xbf16, #tpu.memory_space<vmem>>, %arg13: memref<1x8xf32, #tpu.memory_space<vmem>>, %arg14: memref<1x8x8xf32, #tpu.memory_space<vmem>>) attributes {dimension_semantics = [#tpu.dimension_semantics<parallel>], iteration_bounds = array<i64: 1>, scalar_prefetch = 0 : i64, scratch_operands = 0 : i64, tpu.core_type = #tpu.core_type<tc>, window_params = [{transform_indices = @transform_0, window_bounds = array<i64: 64, 10>}, {pipeline_mode = #tpu.pipeline_mode<synchronous>, transform_indices = @transform_1, window_bounds = array<i64: 10, 64>}, {pipeline_mode = #tpu.pipeline_mode<synchronous>, transform_indices = @transform_2, window_bounds = array<i64: 1, 64>}, {pipeline_mode = #tpu.pipeline_mode<synchronous>, transform_indices = @transform_3, window_bounds = array<i64: 64, 32>}, {pipeline_mode = #tpu.pipeline_mode<synchronous>, transform_indices = @transform_4, window_bounds = array<i64: 1, 32>}, {pipeline_mode = #tpu.pipeline_mode<synchronous>, transform_indices = @transform_5, window_bounds = array<i64: 32, 32>}, {pipeline_mode = #tpu.pipeline_mode<synchronous>, transform_indices = @transform_6, window_bounds = array<i64: 1, 32>}, {pipeline_mode = #tpu.pipeline_mode<synchronous>, transform_indices = @transform_7, window_bounds = array<i64: 32, 64>}, {pipeline_mode = #tpu.pipeline_mode<synchronous>, transform_indices = @transform_8, window_bounds = array<i64: 1, 64>}, {pipeline_mode = #tpu.pipeline_mode<synchronous>, transform_indices = @transform_9, window_bounds = array<i64: 64, 32>}, {pipeline_mode = #tpu.pipeline_mode<synchronous>, transform_indices = @transform_10, window_bounds = array<i64: 1, 32>}, {pipeline_mode = #tpu.pipeline_mode<synchronous>, transform_indices = @transform_11, window_bounds = array<i64: 32, 8>}, {pipeline_mode = #tpu.pipeline_mode<synchronous>, transform_indices = @transform_12, window_bounds = array<i64: 1, 8>}, {transform_indices = @transform_13, window_bounds = array<i64: 1, 8, 8>}]} {
    %c0 = arith.constant 0 : index
    %c0_0 = arith.constant 0 : index
    %0 = vector.load %arg1[%c0, %c0_0] : memref<64x10xf32, #tpu.memory_space<vmem>>, vector<64x10xf32>
    %1 = arith.truncf %0 : vector<64x10xf32> to vector<64x10xbf16>
    %c0_1 = arith.constant 0 : index
    %c0_2 = arith.constant 0 : index
    %2 = vector.load %arg2[%c0_1, %c0_2] : memref<10x64xbf16, #tpu.memory_space<vmem>>, vector<10x64xbf16>
    %cst = arith.constant dense<0.000000e+00> : vector<64x64xf32>
    %3 = tpu.matmul %1, %2, %cst {dimension_numbers = #tpu.dot_dimension_numbers<[1], [0], [0], [1], [0, 0, 1, 1], [], []>} : vector<64x10xbf16>, vector<10x64xbf16>, vector<64x64xf32> -> vector<64x64xf32>
    %c0_3 = arith.constant 0 : index
    %c0_4 = arith.constant 0 : index
    %4 = vector.load %arg3[%c0_3, %c0_4] : memref<1x64xf32, #tpu.memory_space<vmem>>, vector<1x64xf32>
    %5 = vector.broadcast %4 : vector<1x64xf32> to vector<64x64xf32>
    %6 = arith.addf %3, %5 : vector<64x64xf32>
    %cst_5 = arith.constant 0.000000e+00 : f32
    %7 = vector.broadcast %cst_5 : f32 to vector<64x64xf32>
    %8 = arith.maximumf %6, %7 : vector<64x64xf32>
    %9 = arith.truncf %8 : vector<64x64xf32> to vector<64x64xbf16>
    %c0_6 = arith.constant 0 : index
    %c0_7 = arith.constant 0 : index
    %10 = vector.load %arg4[%c0_6, %c0_7] : memref<64x32xbf16, #tpu.memory_space<vmem>>, vector<64x32xbf16>
    %cst_8 = arith.constant dense<0.000000e+00> : vector<64x32xf32>
    %11 = tpu.matmul %9, %10, %cst_8 {dimension_numbers = #tpu.dot_dimension_numbers<[1], [0], [0], [1], [0, 0, 1, 1], [], []>} : vector<64x64xbf16>, vector<64x32xbf16>, vector<64x32xf32> -> vector<64x32xf32>
    %c0_9 = arith.constant 0 : index
    %c0_10 = arith.constant 0 : index
    %12 = vector.load %arg5[%c0_9, %c0_10] : memref<1x32xf32, #tpu.memory_space<vmem>>, vector<1x32xf32>
    %13 = vector.broadcast %12 : vector<1x32xf32> to vector<64x32xf32>
    %14 = arith.addf %11, %13 : vector<64x32xf32>
    %cst_11 = arith.constant 0.000000e+00 : f32
    %15 = vector.broadcast %cst_11 : f32 to vector<64x32xf32>
    %16 = arith.maximumf %14, %15 : vector<64x32xf32>
    %17 = arith.truncf %16 : vector<64x32xf32> to vector<64x32xbf16>
    %c0_12 = arith.constant 0 : index
    %c0_13 = arith.constant 0 : index
    %18 = vector.load %arg6[%c0_12, %c0_13] : memref<32x32xbf16, #tpu.memory_space<vmem>>, vector<32x32xbf16>
    %cst_14 = arith.constant dense<0.000000e+00> : vector<64x32xf32>
    %19 = tpu.matmul %17, %18, %cst_14 {dimension_numbers = #tpu.dot_dimension_numbers<[1], [0], [0], [1], [0, 0, 1, 1], [], []>} : vector<64x32xbf16>, vector<32x32xbf16>, vector<64x32xf32> -> vector<64x32xf32>
    %c0_15 = arith.constant 0 : index
    %c0_16 = arith.constant 0 : index
    %20 = vector.load %arg7[%c0_15, %c0_16] : memref<1x32xf32, #tpu.memory_space<vmem>>, vector<1x32xf32>
    %21 = vector.broadcast %20 : vector<1x32xf32> to vector<64x32xf32>
    %22 = arith.addf %19, %21 : vector<64x32xf32>
    %cst_17 = arith.constant 0.000000e+00 : f32
    %23 = vector.broadcast %cst_17 : f32 to vector<64x32xf32>
    %24 = arith.maximumf %22, %23 : vector<64x32xf32>
    %25 = vector.shape_cast %24 : vector<64x32xf32> to vector<8x8x32xf32>
    %cst_18 = arith.constant dense<0.000000e+00> : vector<8x32xf32>
    %26 = vector.multi_reduction <add>, %25, %cst_18 [1] : vector<8x8x32xf32> to vector<8x32xf32>
    %cst_19 = arith.constant 1.250000e-01 : f32
    %27 = vector.broadcast %cst_19 : f32 to vector<8x32xf32>
    %28 = arith.mulf %26, %27 : vector<8x32xf32>
    %29 = arith.truncf %28 : vector<8x32xf32> to vector<8x32xbf16>
    %c0_20 = arith.constant 0 : index
    %c0_21 = arith.constant 0 : index
    %30 = vector.load %arg8[%c0_20, %c0_21] : memref<32x64xbf16, #tpu.memory_space<vmem>>, vector<32x64xbf16>
    %cst_22 = arith.constant dense<0.000000e+00> : vector<8x64xf32>
    %31 = tpu.matmul %29, %30, %cst_22 {dimension_numbers = #tpu.dot_dimension_numbers<[1], [0], [0], [1], [0, 0, 1, 1], [], []>} : vector<8x32xbf16>, vector<32x64xbf16>, vector<8x64xf32> -> vector<8x64xf32>
    %c0_23 = arith.constant 0 : index
    %c0_24 = arith.constant 0 : index
    %32 = vector.load %arg9[%c0_23, %c0_24] : memref<1x64xf32, #tpu.memory_space<vmem>>, vector<1x64xf32>
    %33 = vector.broadcast %32 : vector<1x64xf32> to vector<8x64xf32>
    %34 = arith.addf %31, %33 : vector<8x64xf32>
    %cst_25 = arith.constant 0.000000e+00 : f32
    %35 = vector.broadcast %cst_25 : f32 to vector<8x64xf32>
    %36 = arith.maximumf %34, %35 : vector<8x64xf32>
    %37 = arith.truncf %36 : vector<8x64xf32> to vector<8x64xbf16>
    %c0_26 = arith.constant 0 : index
    %c0_27 = arith.constant 0 : index
    %38 = vector.load %arg10[%c0_26, %c0_27] : memref<64x32xbf16, #tpu.memory_space<vmem>>, vector<64x32xbf16>
    %cst_28 = arith.constant dense<0.000000e+00> : vector<8x32xf32>
    %39 = tpu.matmul %37, %38, %cst_28 {dimension_numbers = #tpu.dot_dimension_numbers<[1], [0], [0], [1], [0, 0, 1, 1], [], []>} : vector<8x64xbf16>, vector<64x32xbf16>, vector<8x32xf32> -> vector<8x32xf32>
    %c0_29 = arith.constant 0 : index
    %c0_30 = arith.constant 0 : index
    %40 = vector.load %arg11[%c0_29, %c0_30] : memref<1x32xf32, #tpu.memory_space<vmem>>, vector<1x32xf32>
    %41 = vector.broadcast %40 : vector<1x32xf32> to vector<8x32xf32>
    %42 = arith.addf %39, %41 : vector<8x32xf32>
    %cst_31 = arith.constant 0.000000e+00 : f32
    %43 = vector.broadcast %cst_31 : f32 to vector<8x32xf32>
    %44 = arith.maximumf %42, %43 : vector<8x32xf32>
    %45 = arith.truncf %44 : vector<8x32xf32> to vector<8x32xbf16>
    %c0_32 = arith.constant 0 : index
    %c0_33 = arith.constant 0 : index
    %46 = vector.load %arg12[%c0_32, %c0_33] : memref<32x8xbf16, #tpu.memory_space<vmem>>, vector<32x8xbf16>
    %cst_34 = arith.constant dense<0.000000e+00> : vector<8x8xf32>
    %47 = tpu.matmul %45, %46, %cst_34 {dimension_numbers = #tpu.dot_dimension_numbers<[1], [0], [0], [1], [0, 0, 1, 1], [], []>} : vector<8x32xbf16>, vector<32x8xbf16>, vector<8x8xf32> -> vector<8x8xf32>
    %c0_35 = arith.constant 0 : index
    %c0_36 = arith.constant 0 : index
    %48 = vector.load %arg13[%c0_35, %c0_36] : memref<1x8xf32, #tpu.memory_space<vmem>>, vector<1x8xf32>
    %49 = vector.broadcast %48 : vector<1x8xf32> to vector<8x8xf32>
    %50 = arith.addf %47, %49 : vector<8x8xf32>
    %51 = vector.shape_cast %50 : vector<8x8xf32> to vector<1x8x8xf32>
    %c0_37 = arith.constant 0 : index
    %c0_38 = arith.constant 0 : index
    %c0_39 = arith.constant 0 : index
    %52 = vector.load %arg14[%c0_37, %c0_38, %c0_39] : memref<1x8x8xf32, #tpu.memory_space<vmem>>, vector<1x8x8xf32>
    tpu.vector_store %arg14[%c0_37, %c0_38, %c0_39], %51 {strides = array<i32>} : memref<1x8x8xf32, #tpu.memory_space<vmem>>, vector<1x8x8xf32>,
    return
  }
  func.func @transform_0(%arg0: i32) -> (i32, i32) {
    %c0_i32 = arith.constant 0 : i32
    %c0_i32_0 = arith.constant 0 : i32
    return %arg0, %c0_i32 : i32, i32
  }
  func.func @transform_1(%arg0: i32) -> (i32, i32) {
    %c0_i32 = arith.constant 0 : i32
    %c0_i32_0 = arith.constant 0 : i32
    %c0_i32_1 = arith.constant 0 : i32
    return %c0_i32, %c0_i32_0 : i32, i32
  }
  func.func @transform_2(%arg0: i32) -> (i32, i32) {
    %c0_i32 = arith.constant 0 : i32
    %c0_i32_0 = arith.constant 0 : i32
    %c0_i32_1 = arith.constant 0 : i32
    return %c0_i32, %c0_i32_0 : i32, i32
  }
  func.func @transform_3(%arg0: i32) -> (i32, i32) {
    %c0_i32 = arith.constant 0 : i32
    %c0_i32_0 = arith.constant 0 : i32
    %c0_i32_1 = arith.constant 0 : i32
    return %c0_i32, %c0_i32_0 : i32, i32
  }
  func.func @transform_4(%arg0: i32) -> (i32, i32) {
    %c0_i32 = arith.constant 0 : i32
    %c0_i32_0 = arith.constant 0 : i32
    %c0_i32_1 = arith.constant 0 : i32
    return %c0_i32, %c0_i32_0 : i32, i32
  }
  func.func @transform_5(%arg0: i32) -> (i32, i32) {
    %c0_i32 = arith.constant 0 : i32
    %c0_i32_0 = arith.constant 0 : i32
    %c0_i32_1 = arith.constant 0 : i32
    return %c0_i32, %c0_i32_0 : i32, i32
  }
  func.func @transform_6(%arg0: i32) -> (i32, i32) {
    %c0_i32 = arith.constant 0 : i32
    %c0_i32_0 = arith.constant 0 : i32
    %c0_i32_1 = arith.constant 0 : i32
    return %c0_i32, %c0_i32_0 : i32, i32
  }
  func.func @transform_7(%arg0: i32) -> (i32, i32) {
    %c0_i32 = arith.constant 0 : i32
    %c0_i32_0 = arith.constant 0 : i32
    %c0_i32_1 = arith.constant 0 : i32
    return %c0_i32, %c0_i32_0 : i32, i32
  }
  func.func @transform_8(%arg0: i32) -> (i32, i32) {
    %c0_i32 = arith.constant 0 : i32
    %c0_i32_0 = arith.constant 0 : i32
    %c0_i32_1 = arith.constant 0 : i32
    return %c0_i32, %c0_i32_0 : i32, i32
  }
  func.func @transform_9(%arg0: i32) -> (i32, i32) {
    %c0_i32 = arith.constant 0 : i32
    %c0_i32_0 = arith.constant 0 : i32
    %c0_i32_1 = arith.constant 0 : i32
    return %c0_i32, %c0_i32_0 : i32, i32
  }
  func.func @transform_10(%arg0: i32) -> (i32, i32) {
    %c0_i32 = arith.constant 0 : i32
    %c0_i32_0 = arith.constant 0 : i32
    %c0_i32_1 = arith.constant 0 : i32
    return %c0_i32, %c0_i32_0 : i32, i32
  }
  func.func @transform_11(%arg0: i32) -> (i32, i32) {
    %c0_i32 = arith.constant 0 : i32
    %c0_i32_0 = arith.constant 0 : i32
    %c0_i32_1 = arith.constant 0 : i32
    return %c0_i32, %c0_i32_0 : i32, i32
  }
  func.func @transform_12(%arg0: i32) -> (i32, i32) {
    %c0_i32 = arith.constant 0 : i32
    %c0_i32_0 = arith.constant 0 : i32
    %c0_i32_1 = arith.constant 0 : i32
    return %c0_i32, %c0_i32_0 : i32, i32
  }
  func.func @transform_13(%arg0: i32) -> (i32, i32, i32) {
    %c0_i32 = arith.constant 0 : i32
    %c0_i32_0 = arith.constant 0 : i32
    %c0_i32_1 = arith.constant 0 : i32
    return %arg0, %c0_i32, %c0_i32_0 : i32, i32, i32
  }
}

</mosaic_0001>

<llo_original>
// kernel: tpu_custom_call.1
$region0: #{tpu_custom_call.1}
  #allocation0 [shape = 'u32[]', space=smem, size = 0x4, offset = 0x4, fixed_abs, tag = 'smem constant byte address 0x4 - core index']
  #allocation1 [shape = 'u32[144,128]{1,0:T(1,128)}', space=vmem, size = 0x12000, scoped, tag = 'internal scratch']
  %s0 = inlined_call_operand.vmem [shape: f32[64,10], index: 0, kind: input, shape index: {}]
  %s1 = inlined_call_operand.vmem [shape: bf16[10,64], index: 1, kind: input, shape index: {}]
  %s2 = inlined_call_operand.vmem [shape: f32[1,64], index: 2, kind: input, shape index: {}]
  %s3 = inlined_call_operand.vmem [shape: bf16[64,32], index: 3, kind: input, shape index: {}]
  %s4 = inlined_call_operand.vmem [shape: f32[1,32], index: 4, kind: input, shape index: {}]
  %s5 = inlined_call_operand.vmem [shape: bf16[32,32], index: 5, kind: input, shape index: {}]
  %s6 = inlined_call_operand.vmem [shape: f32[1,32], index: 6, kind: input, shape index: {}]
  %s7 = inlined_call_operand.vmem [shape: bf16[32,64], index: 7, kind: input, shape index: {}]
  %s8 = inlined_call_operand.vmem [shape: f32[1,64], index: 8, kind: input, shape index: {}]
  %s9 = inlined_call_operand.vmem [shape: bf16[64,32], index: 9, kind: input, shape index: {}]
  %s10 = inlined_call_operand.vmem [shape: f32[1,32], index: 10, kind: input, shape index: {}]
  %s11 = inlined_call_operand.vmem [shape: bf16[32,8], index: 11, kind: input, shape index: {}]
  %s12 = inlined_call_operand.vmem [shape: f32[1,8], index: 12, kind: input, shape index: {}]
  %s13 = inlined_call_operand.hbm [shape: f32[1,8,8], index: 13, kind: output, shape index: {}]
  %s14 = sld [smem:[#allocation0]]
  $region62: #{tpu_custom_call.1} parent=0
    _
  %s16 = ssub.s32 1, %s14
  %s17 = scalar_select 0, %s16, %s14
  $region1: #{tpu_custom_call.1} parent=0
    #allocation2 [shape = 'u8[4096]{0}', space=vmem, size = 0x1000, scoped, tag = 'output window, operand 0, single buffered']
    #allocation3 [shape = 's32[1]{0}', space=sflag, size = 0x4, scoped, tag = 'scoped memory for tpu_custom_call.1']
    %18 = vsyncpa [#allocation3], 0
    // Predicated region
    $region2: #{tpu_custom_call.1} parent=1 // pred_check
      _
    $region3: #{tpu_custom_call.1} parent=1 // pred_check_branch
      %20 = sbr.rel (0) target = $region5
    $region4: #{tpu_custom_call.1} parent=1 // pred_region
      _
    $region5: #{tpu_custom_call.1} parent=1 // pred_fallthru
      _
    // Predicated region
    $region6: #{tpu_custom_call.1} parent=1 // pred_check
      _
    $region7: #{tpu_custom_call.1} parent=1 // pred_check_branch
      %22 = sbr.rel (0) target = $region9
    $region8: #{tpu_custom_call.1} parent=1 // pred_region
      _
    $region9: #{tpu_custom_call.1} parent=1 // pred_fallthru
      _
    // Predicated region
    $region10: #{tpu_custom_call.1} parent=1 // pred_check
      _
    $region11: #{tpu_custom_call.1} parent=1 // pred_check_branch
      %24 = sbr.rel (0) target = $region13
    $region12: #{tpu_custom_call.1} parent=1 // pred_region
      _
    $region13: #{tpu_custom_call.1} parent=1 // pred_fallthru
      _
    // Predicated region
    $region14: #{tpu_custom_call.1} parent=1 // pred_check
      _
    $region15: #{tpu_custom_call.1} parent=1 // pred_check_branch
      %26 = sbr.rel (0) target = $region17
    $region16: #{tpu_custom_call.1} parent=1 // pred_region
      _
    $region17: #{tpu_custom_call.1} parent=1 // pred_fallthru
      _
    // Predicated region
    $region18: #{tpu_custom_call.1} parent=1 // pred_check
      _
    $region19: #{tpu_custom_call.1} parent=1 // pred_check_branch
      %28 = sbr.rel (0) target = $region21
    $region20: #{tpu_custom_call.1} parent=1 // pred_region
      _
    $region21: #{tpu_custom_call.1} parent=1 // pred_fallthru
      _
    // Predicated region
    $region22: #{tpu_custom_call.1} parent=1 // pred_check
      _
    $region23: #{tpu_custom_call.1} parent=1 // pred_check_branch
      %30 = sbr.rel (0) target = $region25
    $region24: #{tpu_custom_call.1} parent=1 // pred_region
      _
    $region25: #{tpu_custom_call.1} parent=1 // pred_fallthru
      _
    // Predicated region
    $region26: #{tpu_custom_call.1} parent=1 // pred_check
      _
    $region27: #{tpu_custom_call.1} parent=1 // pred_check_branch
      %32 = sbr.rel (0) target = $region29
    $region28: #{tpu_custom_call.1} parent=1 // pred_region
      _
    $region29: #{tpu_custom_call.1} parent=1 // pred_fallthru
      _
    // Predicated region
    $region30: #{tpu_custom_call.1} parent=1 // pred_check
      _
    $region31: #{tpu_custom_call.1} parent=1 // pred_check_branch
      %34 = sbr.rel (0) target = $region33
    $region32: #{tpu_custom_call.1} parent=1 // pred_region
      _
    $region33: #{tpu_custom_call.1} parent=1 // pred_fallthru
      _
    // Predicated region
    $region34: #{tpu_custom_call.1} parent=1 // pred_check
      _
    $region35: #{tpu_custom_call.1} parent=1 // pred_check_branch
      %36 = sbr.rel (0) target = $region37
    $region36: #{tpu_custom_call.1} parent=1 // pred_region
      _
    $region37: #{tpu_custom_call.1} parent=1 // pred_fallthru
      _
    // Predicated region
    $region38: #{tpu_custom_call.1} parent=1 // pred_check
      _
    $region39: #{tpu_custom_call.1} parent=1 // pred_check_branch
      %38 = sbr.rel (0) target = $region41
    $region40: #{tpu_custom_call.1} parent=1 // pred_region
      _
    $region41: #{tpu_custom_call.1} parent=1 // pred_fallthru
      _
    // Predicated region
    $region42: #{tpu_custom_call.1} parent=1 // pred_check
      _
    $region43: #{tpu_custom_call.1} parent=1 // pred_check_branch
      %40 = sbr.rel (0) target = $region45
    $region44: #{tpu_custom_call.1} parent=1 // pred_region
      _
    $region45: #{tpu_custom_call.1} parent=1 // pred_fallthru
      _
    // Predicated region
    $region46: #{tpu_custom_call.1} parent=1 // pred_check
      _
    $region47: #{tpu_custom_call.1} parent=1 // pred_check_branch
      %42 = sbr.rel (0) target = $region49
    $region48: #{tpu_custom_call.1} parent=1 // pred_region
      _
    $region49: #{tpu_custom_call.1} parent=1 // pred_fallthru
      _
    // Predicated region
    $region50: #{tpu_custom_call.1} parent=1 // pred_check
      _
    $region51: #{tpu_custom_call.1} parent=1 // pred_check_branch
      %44 = sbr.rel (0) target = $region53
    $region52: #{tpu_custom_call.1} parent=1 // pred_region
      _
    $region53: #{tpu_custom_call.1} parent=1 // pred_fallthru
      _
    %v46 = vld [vmem:[%s0] sm:$0xff]
    %v47 = vld [vmem:[%s0 + $0x8] sm:$0xff]
    %v48 = vld [vmem:[%s0 + $0x10] sm:$0xff]
    %v49 = vld [vmem:[%s0 + $0x18] sm:$0xff]
    %v50 = vld [vmem:[%s0 + $0x20] sm:$0xff]
    %v51 = vld [vmem:[%s0 + $0x28] sm:$0xff]
    %v52 = vld [vmem:[%s0 + $0x30] sm:$0xff]
    %v53 = vld [vmem:[%s0 + $0x38] sm:$0xff]
    %v54 = vpack.c.bf16 %v47, %v46
    %v55 = vpack.c.bf16 %v49, %v48
    %v56 = vpack.c.bf16 %v51, %v50
    %v57 = vpack.c.bf16 %v53, %v52
    %v58 = vld [vmem:[%s1] sm:$0xf]
    %v59 = vld [vmem:[%s1 + $0x4] sm:$0x1]
    %v60 = vld [vmem:[%s2] sm:$0x1]
    %v62 = vlaneseq
    %v63 = vshrl.u32 %v62, 7
    %v64 = vsub.s32 0, %v63
    %v65 = vrot.slane %v60, %v64
    %v69 = vunpack.c.l.b16 %v58
    %v70 = vunpack.c.l.b16 %v59
    %v71 = vpack.c.b16 %v70, %v69
    %vm72 = vcmask 80896
    %v74 = vsel %vm72, %v54, 0
    %v77 = vsel %vm72, %v55, 0
    %v80 = vsel %vm72, %v56, 0
    %v83 = vsel %vm72, %v57, 0
    %vm85 = vcmask 1044480
    %v87 = vsel %vm85, %v71, 0
    %89 = vmatprep.subr.bf16.mxu0 0
    %90 = vmatpush1.bf16.msra.mxu0 0
    %91 = vmatprep.subr.bf16.mxu0 0
    %92 = vmatpush1.bf16.msra.mxu0 0
    %93 = vmatprep.subr.bf16.mxu0 0
    %94 = vmatpush1.bf16.msra.mxu0 0
    %95 = vmatprep.subr.bf16.mxu0 0
    %96 = vmatpush1.bf16.msra.mxu0 0
    %97 = vmatprep.subr.bf16.mxu0 0
    %98 = vmatpush1.bf16.msra.mxu0 0
    %99 = vmatprep.subr.bf16.mxu0 0
    %100 = vmatpush1.bf16.msra.mxu0 0
    %101 = vmatprep.subr.bf16.mxu0 0
    %102 = vmatpush1.bf16.msra.mxu0 0
    %103 = vmatprep.subr.bf16.mxu0 0
    %104 = vmatpush1.bf16.msra.mxu0 %v87
    %105 = vmatprep.subr.bf16.mxu0 0
    %106 = vmatpush2.bf16.msra.mxu0 0
    %107 = vmatprep.subr.bf16.mxu0 0
    %108 = vmatpush2.bf16.msra.mxu0 0
    %109 = vmatprep.subr.bf16.mxu0 0
    %110 = vmatpush2.bf16.msra.mxu0 0
    %111 = vmatprep.subr.bf16.mxu0 0
    %112 = vmatpush2.bf16.msra.mxu0 0
    %113 = vmatprep.subr.bf16.mxu0 0
    %114 = vmatpush2.bf16.msra.mxu0 0
    %115 = vmatprep.subr.bf16.mxu0 0
    %116 = vmatpush2.bf16.msra.mxu0 0
    %117 = vmatprep.subr.bf16.mxu0 0
    %118 = vmatpush2.bf16.msra.mxu0 0
    %119 = vmatprep.subr.bf16.mxu0 0
    %120 = vmatpush2.bf16.msra.mxu0 0
    %121 = vmatprep.mubr.bf16.mxu0 0
    %122 = vmatmul.mubr.bf16.gmra.mxu0 %v74
    %v123 = vpop.f32.mrf.mxu0
    %v124 = vadd.f32 %v65, %v123
    %v125 = vpop.f32.mrf.mxu0
    %v126 = vpop.f32.mrf.mxu0
    %v127 = vadd.f32 %v65, %v126
    %v128 = vpop.f32.mrf.mxu0
    %129 = vmatprep.mubr.bf16.mxu0 0
    %130 = vmatmul.mubr.bf16.gmra.mxu0 %v77
    %v131 = vpop.f32.mrf.mxu0
    %v132 = vadd.f32 %v65, %v131
    %v133 = vpop.f32.mrf.mxu0
    %v134 = vpop.f32.mrf.mxu0
    %v135 = vadd.f32 %v65, %v134
    %v136 = vpop.f32.mrf.mxu0
    %137 = vmatprep.mubr.bf16.mxu0 0
    %138 = vmatmul.mubr.bf16.gmra.mxu0 %v80
    %v139 = vpop.f32.mrf.mxu0
    %v140 = vadd.f32 %v65, %v139
    %v141 = vpop.f32.mrf.mxu0
    %v142 = vpop.f32.mrf.mxu0
    %v143 = vadd.f32 %v65, %v142
    %v144 = vpop.f32.mrf.mxu0
    %145 = vmatprep.mubr.bf16.mxu0 0
    %146 = vmatmul.mubr.bf16.gmra.mxu0 %v83
    %v147 = vpop.f32.mrf.mxu0
    %v148 = vadd.f32 %v65, %v147
    %v149 = vpop.f32.mrf.mxu0
    %v150 = vpop.f32.mrf.mxu0
    %v151 = vadd.f32 %v65, %v150
    %v152 = vpop.f32.mrf.mxu0
    %153 = vdwg.mxu0
    %v154 = vmax.f32 %v124, 0.0
    %v155 = vmax.f32 %v127, 0.0
    %v156 = vmax.f32 %v132, 0.0
    %v157 = vmax.f32 %v135, 0.0
    %v158 = vmax.f32 %v140, 0.0
    %v159 = vmax.f32 %v143, 0.0
    %v160 = vmax.f32 %v148, 0.0
    %v161 = vmax.f32 %v151, 0.0
    %v162 = vpack.c.bf16 %v155, %v154
    %v163 = vpack.c.bf16 %v157, %v156
    %v164 = vpack.c.bf16 %v159, %v158
    %v165 = vpack.c.bf16 %v161, %v160
    %v166 = vld [vmem:[%s3] sm:$0xf]
    %v167 = vld [vmem:[%s3 + $0x4] sm:$0xf]
    %v168 = vld [vmem:[%s3 + $0x8] sm:$0xf]
    %v169 = vld [vmem:[%s3 + $0xc] sm:$0xf]
    %v170 = vld [vmem:[%s3 + $0x10] sm:$0xf]
    %v171 = vld [vmem:[%s3 + $0x14] sm:$0xf]
    %v172 = vld [vmem:[%s3 + $0x18] sm:$0xf]
    %v173 = vld [vmem:[%s3 + $0x1c] sm:$0xf]
    %v174 = vld [vmem:[%s4] sm:$0x1]
    %v176 = vlaneseq
    %v177 = vshrl.u32 %v176, 7
    %v178 = vsub.s32 0, %v177
    %v179 = vrot.slane %v174, %v178
    %v189 = vunpack.c.l.b16 %v166
    %v190 = vunpack.c.l.b16 %v167
    %v191 = vunpack.c.l.b16 %v168
    %v192 = vunpack.c.l.b16 %v169
    %v193 = vunpack.c.l.b16 %v170
    %v194 = vunpack.c.l.b16 %v171
    %v195 = vunpack.c.l.b16 %v172
    %v196 = vunpack.c.l.b16 %v173
    %v197 = vpack.c.b16 %v190, %v189
    %v198 = vpack.c.b16 %v192, %v191
    %v199 = vpack.c.b16 %v194, %v193
    %v200 = vpack.c.b16 %v196, %v195
    %vm205 = vcmask 523264
    %v207 = vsel %vm205, %v162, 0
    %v210 = vsel %vm205, %v163, 0
    %v213 = vsel %vm205, %v164, 0
    %v216 = vsel %vm205, %v165, 0
    %218 = vmatprep.subr.bf16.mxu0 0
    %219 = vmatpush1.bf16.msra.mxu0 0
    %220 = vmatprep.subr.bf16.mxu0 0
    %221 = vmatpush1.bf16.msra.mxu0 0
    %222 = vmatprep.subr.bf16.mxu0 0
    %223 = vmatpush1.bf16.msra.mxu0 0
    %224 = vmatprep.subr.bf16.mxu0 0
    %225 = vmatpush1.bf16.msra.mxu0 0
    %226 = vmatprep.subr.bf16.mxu0 0
    %227 = vmatpush1.bf16.msra.mxu0 %v200
    %228 = vmatprep.subr.bf16.mxu0 0
    %229 = vmatpush1.bf16.msra.mxu0 %v199
    %230 = vmatprep.subr.bf16.mxu0 0
    %231 = vmatpush1.bf16.msra.mxu0 %v198
    %232 = vmatprep.subr.bf16.mxu0 0
    %233 = vmatpush1.bf16.msra.mxu0 %v197
    %234 = vmatprep.subr.bf16.mxu0 0
    %235 = vmatpush2.bf16.msra.mxu0 0
    %236 = vmatprep.subr.bf16.mxu0 0
    %237 = vmatpush2.bf16.msra.mxu0 0
    %238 = vmatprep.subr.bf16.mxu0 0
    %239 = vmatpush2.bf16.msra.mxu0 0
    %240 = vmatprep.subr.bf16.mxu0 0
    %241 = vmatpush2.bf16.msra.mxu0 0
    %242 = vmatprep.subr.bf16.mxu0 0
    %243 = vmatpush2.bf16.msra.mxu0 0
    %244 = vmatprep.subr.bf16.mxu0 0
    %245 = vmatpush2.bf16.msra.mxu0 0
    %246 = vmatprep.subr.bf16.mxu0 0
    %247 = vmatpush2.bf16.msra.mxu0 0
    %248 = vmatprep.subr.bf16.mxu0 0
    %249 = vmatpush2.bf16.msra.mxu0 0
    %250 = vmatprep.mubr.bf16.mxu0 0
    %251 = vmatmul.mubr.bf16.gmra.mxu0 %v207
    %v252 = vpop.f32.mrf.mxu0
    %v253 = vadd.f32 %v179, %v252
    %v254 = vpop.f32.mrf.mxu0
    %v255 = vpop.f32.mrf.mxu0
    %v256 = vadd.f32 %v179, %v255
    %v257 = vpop.f32.mrf.mxu0
    %258 = vmatprep.mubr.bf16.mxu0 0
    %259 = vmatmul.mubr.bf16.gmra.mxu0 %v210
    %v260 = vpop.f32.mrf.mxu0
    %v261 = vadd.f32 %v179, %v260
    %v262 = vpop.f32.mrf.mxu0
    %v263 = vpop.f32.mrf.mxu0
    %v264 = vadd.f32 %v179, %v263
    %v265 = vpop.f32.mrf.mxu0
    %266 = vmatprep.mubr.bf16.mxu0 0
    %267 = vmatmul.mubr.bf16.gmra.mxu0 %v213
    %v268 = vpop.f32.mrf.mxu0
    %v269 = vadd.f32 %v179, %v268
    %v270 = vpop.f32.mrf.mxu0
    %v271 = vpop.f32.mrf.mxu0
    %v272 = vadd.f32 %v179, %v271
    %v273 = vpop.f32.mrf.mxu0
    %274 = vmatprep.mubr.bf16.mxu0 0
    %275 = vmatmul.mubr.bf16.gmra.mxu0 %v216
    %v276 = vpop.f32.mrf.mxu0
    %v277 = vadd.f32 %v179, %v276
    %v278 = vpop.f32.mrf.mxu0
    %v279 = vpop.f32.mrf.mxu0
    %v280 = vadd.f32 %v179, %v279
    %v281 = vpop.f32.mrf.mxu0
    %282 = vdwg.mxu0
    %v283 = vmax.f32 %v253, 0.0
    %v284 = vmax.f32 %v256, 0.0
    %v285 = vmax.f32 %v261, 0.0
    %v286 = vmax.f32 %v264, 0.0
    %v287 = vmax.f32 %v269, 0.0
    %v288 = vmax.f32 %v272, 0.0
    %v289 = vmax.f32 %v277, 0.0
    %v290 = vmax.f32 %v280, 0.0
    %v291 = vpack.c.bf16 %v284, %v283
    %v292 = vpack.c.bf16 %v286, %v285
    %v293 = vpack.c.bf16 %v288, %v287
    %v294 = vpack.c.bf16 %v290, %v289
    %v295 = vld [vmem:[%s5] sm:$0xf]
    %v296 = vld [vmem:[%s5 + $0x4] sm:$0xf]
    %v297 = vld [vmem:[%s5 + $0x8] sm:$0xf]
    %v298 = vld [vmem:[%s5 + $0xc] sm:$0xf]
    %v299 = vld [vmem:[%s6] sm:$0x1]
    %v301 = vlaneseq
    %v302 = vshrl.u32 %v301, 7
    %v303 = vsub.s32 0, %v302
    %v304 = vrot.slane %v299, %v303
    %v310 = vunpack.c.l.b16 %v295
    %v311 = vunpack.c.l.b16 %v296
    %v312 = vunpack.c.l.b16 %v297
    %v313 = vunpack.c.l.b16 %v298
    %v314 = vpack.c.b16 %v311, %v310
    %v315 = vpack.c.b16 %v313, %v312
    %vm318 = vcmask 261120
    %v320 = vsel %vm318, %v291, 0
    %v323 = vsel %vm318, %v292, 0
    %v326 = vsel %vm318, %v293, 0
    %v329 = vsel %vm318, %v294, 0
    %331 = vmatprep.subr.bf16.mxu0 0
    %332 = vmatpush1.bf16.msra.mxu0 0
    %333 = vmatprep.subr.bf16.mxu0 0
    %334 = vmatpush1.bf16.msra.mxu0 0
    %335 = vmatprep.subr.bf16.mxu0 0
    %336 = vmatpush1.bf16.msra.mxu0 0
    %337 = vmatprep.subr.bf16.mxu0 0
    %338 = vmatpush1.bf16.msra.mxu0 0
    %339 = vmatprep.subr.bf16.mxu0 0
    %340 = vmatpush1.bf16.msra.mxu0 0
    %341 = vmatprep.subr.bf16.mxu0 0
    %342 = vmatpush1.bf16.msra.mxu0 0
    %343 = vmatprep.subr.bf16.mxu0 0
    %344 = vmatpush1.bf16.msra.mxu0 %v315
    %345 = vmatprep.subr.bf16.mxu0 0
    %346 = vmatpush1.bf16.msra.mxu0 %v314
    %347 = vmatprep.subr.bf16.mxu0 0
    %348 = vmatpush2.bf16.msra.mxu0 0
    %349 = vmatprep.subr.bf16.mxu0 0
    %350 = vmatpush2.bf16.msra.mxu0 0
    %351 = vmatprep.subr.bf16.mxu0 0
    %352 = vmatpush2.bf16.msra.mxu0 0
    %353 = vmatprep.subr.bf16.mxu0 0
    %354 = vmatpush2.bf16.msra.mxu0 0
    %355 = vmatprep.subr.bf16.mxu0 0
    %356 = vmatpush2.bf16.msra.mxu0 0
    %357 = vmatprep.subr.bf16.mxu0 0
    %358 = vmatpush2.bf16.msra.mxu0 0
    %359 = vmatprep.subr.bf16.mxu0 0
    %360 = vmatpush2.bf16.msra.mxu0 0
    %361 = vmatprep.subr.bf16.mxu0 0
    %362 = vmatpush2.bf16.msra.mxu0 0
    %363 = vmatprep.mubr.bf16.mxu0 0
    %364 = vmatmul.mubr.bf16.gmra.mxu0 %v320
    %v365 = vpop.f32.mrf.mxu0
    %v366 = vadd.f32 %v304, %v365
    %v367 = vpop.f32.mrf.mxu0
    %v368 = vpop.f32.mrf.mxu0
    %v369 = vadd.f32 %v304, %v368
    %v370 = vpop.f32.mrf.mxu0
    %371 = vmatprep.mubr.bf16.mxu0 0
    %372 = vmatmul.mubr.bf16.gmra.mxu0 %v323
    %v373 = vpop.f32.mrf.mxu0
    %v374 = vadd.f32 %v304, %v373
    %v375 = vpop.f32.mrf.mxu0
    %v376 = vpop.f32.mrf.mxu0
    %v377 = vadd.f32 %v304, %v376
    %v378 = vpop.f32.mrf.mxu0
    %379 = vmatprep.mubr.bf16.mxu0 0
    %380 = vmatmul.mubr.bf16.gmra.mxu0 %v326
    %v381 = vpop.f32.mrf.mxu0
    %v382 = vadd.f32 %v304, %v381
    %v383 = vpop.f32.mrf.mxu0
    %v384 = vpop.f32.mrf.mxu0
    %v385 = vadd.f32 %v304, %v384
    %v386 = vpop.f32.mrf.mxu0
    %387 = vmatprep.mubr.bf16.mxu0 0
    %388 = vmatmul.mubr.bf16.gmra.mxu0 %v329
    %v389 = vpop.f32.mrf.mxu0
    %v390 = vadd.f32 %v304, %v389
    %v391 = vpop.f32.mrf.mxu0
    %v392 = vpop.f32.mrf.mxu0
    %v393 = vadd.f32 %v304, %v392
    %v394 = vpop.f32.mrf.mxu0
    %395 = vdwg.mxu0
    %v396 = vmax.f32 %v366, 0.0
    %v397 = vmax.f32 %v369, 0.0
    %v398 = vmax.f32 %v374, 0.0
    %v399 = vmax.f32 %v377, 0.0
    %v400 = vmax.f32 %v382, 0.0
    %v401 = vmax.f32 %v385, 0.0
    %v402 = vmax.f32 %v390, 0.0
    %v403 = vmax.f32 %v393, 0.0
    %v404 = vsel %vm318, %v396, 0.0
    %v405 = vrot.slane %v404, 4
    %v406 = vadd.f32 %v404, %v405
    %v407 = vrot.slane %v406, 2
    %v408 = vadd.f32 %v406, %v407
    %v409 = vrot.slane %v408, 1
    %v410 = vadd.f32 %v408, %v409
    %v411 = vsel %vm318, %v397, 0.0
    %v412 = vrot.slane %v411, 4
    %v413 = vadd.f32 %v411, %v412
    %v414 = vrot.slane %v413, 2
    %v415 = vadd.f32 %v413, %v414
    %v416 = vrot.slane %v415, 1
    %v417 = vadd.f32 %v415, %v416
    %v418 = vsel %vm318, %v398, 0.0
    %v419 = vrot.slane %v418, 4
    %v420 = vadd.f32 %v418, %v419
    %v421 = vrot.slane %v420, 2
    %v422 = vadd.f32 %v420, %v421
    %v423 = vrot.slane %v422, 1
    %v424 = vadd.f32 %v422, %v423
    %v425 = vsel %vm318, %v399, 0.0
    %v426 = vrot.slane %v425, 4
    %v427 = vadd.f32 %v425, %v426
    %v428 = vrot.slane %v427, 2
    %v429 = vadd.f32 %v427, %v428
    %v430 = vrot.slane %v429, 1
    %v431 = vadd.f32 %v429, %v430
    %v432 = vsel %vm318, %v400, 0.0
    %v433 = vrot.slane %v432, 4
    %v434 = vadd.f32 %v432, %v433
    %v435 = vrot.slane %v434, 2
    %v436 = vadd.f32 %v434, %v435
    %v437 = vrot.slane %v436, 1
    %v438 = vadd.f32 %v436, %v437
    %v439 = vsel %vm318, %v401, 0.0
    %v440 = vrot.slane %v439, 4
    %v441 = vadd.f32 %v439, %v440
    %v442 = vrot.slane %v441, 2
    %v443 = vadd.f32 %v441, %v442
    %v444 = vrot.slane %v443, 1
    %v445 = vadd.f32 %v443, %v444
    %v446 = vsel %vm318, %v402, 0.0
    %v447 = vrot.slane %v446, 4
    %v448 = vadd.f32 %v446, %v447
    %v449 = vrot.slane %v448, 2
    %v450 = vadd.f32 %v448, %v449
    %v451 = vrot.slane %v450, 1
    %v452 = vadd.f32 %v450, %v451
    %v453 = vsel %vm318, %v403, 0.0
    %v454 = vrot.slane %v453, 4
    %v455 = vadd.f32 %v453, %v454
    %v456 = vrot.slane %v455, 2
    %v457 = vadd.f32 %v455, %v456
    %v458 = vrot.slane %v457, 1
    %v459 = vadd.f32 %v457, %v458
    %v460 = vmul.f32 %v410, 0.125
    %v461 = vmul.f32 %v417, 0.125
    %v462 = vmul.f32 %v424, 0.125
    %v463 = vmul.f32 %v431, 0.125
    %v464 = vmul.f32 %v438, 0.125
    %v465 = vmul.f32 %v445, 0.125
    %v466 = vmul.f32 %v452, 0.125
    %v467 = vmul.f32 %v459, 0.125
    %v468 = vpack.c.bf16 %v460, %v460
    %v469 = vpack.c.bf16 %v461, %v461
    %v470 = vpack.c.bf16 %v462, %v462
    %v471 = vpack.c.bf16 %v463, %v463
    %v472 = vpack.c.bf16 %v464, %v464
    %v473 = vpack.c.bf16 %v465, %v465
    %v474 = vpack.c.bf16 %v466, %v466
    %v475 = vpack.c.bf16 %v467, %v467
    %v476 = vld [vmem:[%s7] sm:$0xf]
    %v477 = vld [vmem:[%s7 + $0x4] sm:$0xf]
    %v478 = vld [vmem:[%s7 + $0x8] sm:$0xf]
    %v479 = vld [vmem:[%s7 + $0xc] sm:$0xf]
    %v480 = vld [vmem:[%s8] sm:$0x1]
    %v482 = vlaneseq
    %v483 = vshrl.u32 %v482, 7
    %v484 = vsub.s32 0, %v483
    %v485 = vrot.slane %v480, %v484
    %v495 = vunpack.c.l.b16 %v468
    %v496 = vunpack.c.l.b16 %v469
    %v497 = vunpack.c.l.b16 %v470
    %v498 = vunpack.c.l.b16 %v471
    %v499 = vunpack.c.l.b16 %v472
    %v500 = vunpack.c.l.b16 %v473
    %v501 = vunpack.c.l.b16 %v474
    %v502 = vunpack.c.l.b16 %v475
    %vm503 = vcmask 1041409
    %v504 = vsel %vm503, %v496, %v495
    %vm505 = vcmask 1042434
    %v506 = vsel %vm505, %v497, %v504
    %vm507 = vcmask 1043459
    %v508 = vsel %vm507, %v498, %v506
    %vm509 = vcmask 1044484
    %v510 = vsel %vm509, %v499, %v508
    %vm511 = vcmask 1045509
    %v512 = vsel %vm511, %v500, %v510
    %vm513 = vcmask 1046534
    %v514 = vsel %vm513, %v501, %v512
    %vm515 = vcmask 1047559
    %v516 = vsel %vm515, %v502, %v514
    %v517 = vpack.c.b16 %v516, %v516
    %v522 = vunpack.c.l.b16 %v476
    %v523 = vunpack.c.l.b16 %v477
    %v524 = vunpack.c.l.b16 %v478
    %v525 = vunpack.c.l.b16 %v479
    %v526 = vpack.c.b16 %v523, %v522
    %v527 = vpack.c.b16 %v525, %v524
    %v531 = vsel %vm318, %v517, 0
    %533 = vmatprep.subr.bf16.mxu0 0
    %534 = vmatpush1.bf16.msra.mxu0 0
    %535 = vmatprep.subr.bf16.mxu0 0
    %536 = vmatpush1.bf16.msra.mxu0 0
    %537 = vmatprep.subr.bf16.mxu0 0
    %538 = vmatpush1.bf16.msra.mxu0 0
    %539 = vmatprep.subr.bf16.mxu0 0
    %540 = vmatpush1.bf16.msra.mxu0 0
    %541 = vmatprep.subr.bf16.mxu0 0
    %542 = vmatpush1.bf16.msra.mxu0 0
    %543 = vmatprep.subr.bf16.mxu0 0
    %544 = vmatpush1.bf16.msra.mxu0 0
    %545 = vmatprep.subr.bf16.mxu0 0
    %546 = vmatpush1.bf16.msra.mxu0 %v527
    %547 = vmatprep.subr.bf16.mxu0 0
    %548 = vmatpush1.bf16.msra.mxu0 %v526
    %549 = vmatprep.subr.bf16.mxu0 0
    %550 = vmatpush2.bf16.msra.mxu0 0
    %551 = vmatprep.subr.bf16.mxu0 0
    %552 = vmatpush2.bf16.msra.mxu0 0
    %553 = vmatprep.subr.bf16.mxu0 0
    %554 = vmatpush2.bf16.msra.mxu0 0
    %555 = vmatprep.subr.bf16.mxu0 0
    %556 = vmatpush2.bf16.msra.mxu0 0
    %557 = vmatprep.subr.bf16.mxu0 0
    %558 = vmatpush2.bf16.msra.mxu0 0
    %559 = vmatprep.subr.bf16.mxu0 0
    %560 = vmatpush2.bf16.msra.mxu0 0
    %561 = vmatprep.subr.bf16.mxu0 0
    %562 = vmatpush2.bf16.msra.mxu0 0
    %563 = vmatprep.subr.bf16.mxu0 0
    %564 = vmatpush2.bf16.msra.mxu0 0
    %565 = vmatprep.mubr.bf16.mxu0 0
    %566 = vmatmul.mubr.bf16.gmra.mxu0 %v531
    %v567 = vpop.f32.mrf.mxu0
    %v568 = vadd.f32 %v485, %v567
    %v569 = vpop.f32.mrf.mxu0
    %v570 = vpop.f32.mrf.mxu0
    %v571 = vpop.f32.mrf.mxu0
    %572 = vdwg.mxu0
    %v573 = vmax.f32 %v568, 0.0
    %v574 = vpack.c.bf16 %v573, %v573
    %v575 = vld [vmem:[%s9] sm:$0xf]
    %v576 = vld [vmem:[%s9 + $0x4] sm:$0xf]
    %v577 = vld [vmem:[%s9 + $0x8] sm:$0xf]
    %v578 = vld [vmem:[%s9 + $0xc] sm:$0xf]
    %v579 = vld [vmem:[%s9 + $0x10] sm:$0xf]
    %v580 = vld [vmem:[%s9 + $0x14] sm:$0xf]
    %v581 = vld [vmem:[%s9 + $0x18] sm:$0xf]
    %v582 = vld [vmem:[%s9 + $0x1c] sm:$0xf]
    %v583 = vld [vmem:[%s10] sm:$0x1]
    %v585 = vlaneseq
    %v586 = vshrl.u32 %v585, 7
    %v587 = vsub.s32 0, %v586
    %v588 = vrot.slane %v583, %v587
    %v598 = vunpack.c.l.b16 %v575
    %v599 = vunpack.c.l.b16 %v576
    %v600 = vunpack.c.l.b16 %v577
    %v601 = vunpack.c.l.b16 %v578
    %v602 = vunpack.c.l.b16 %v579
    %v603 = vunpack.c.l.b16 %v580
    %v604 = vunpack.c.l.b16 %v581
    %v605 = vunpack.c.l.b16 %v582
    %v606 = vpack.c.b16 %v599, %v598
    %v607 = vpack.c.b16 %v601, %v600
    %v608 = vpack.c.b16 %v603, %v602
    %v609 = vpack.c.b16 %v605, %v604
    %v615 = vsel %vm205, %v574, 0
    %617 = vmatprep.subr.bf16.mxu0 0
    %618 = vmatpush1.bf16.msra.mxu0 0
    %619 = vmatprep.subr.bf16.mxu0 0
    %620 = vmatpush1.bf16.msra.mxu0 0
    %621 = vmatprep.subr.bf16.mxu0 0
    %622 = vmatpush1.bf16.msra.mxu0 0
    %623 = vmatprep.subr.bf16.mxu0 0
    %624 = vmatpush1.bf16.msra.mxu0 0
    %625 = vmatprep.subr.bf16.mxu0 0
    %626 = vmatpush1.bf16.msra.mxu0 %v609
    %627 = vmatprep.subr.bf16.mxu0 0
    %628 = vmatpush1.bf16.msra.mxu0 %v608
    %629 = vmatprep.subr.bf16.mxu0 0
    %630 = vmatpush1.bf16.msra.mxu0 %v607
    %631 = vmatprep.subr.bf16.mxu0 0
    %632 = vmatpush1.bf16.msra.mxu0 %v606
    %633 = vmatprep.subr.bf16.mxu0 0
    %634 = vmatpush2.bf16.msra.mxu0 0
    %635 = vmatprep.subr.bf16.mxu0 0
    %636 = vmatpush2.bf16.msra.mxu0 0
    %637 = vmatprep.subr.bf16.mxu0 0
    %638 = vmatpush2.bf16.msra.mxu0 0
    %639 = vmatprep.subr.bf16.mxu0 0
    %640 = vmatpush2.bf16.msra.mxu0 0
    %641 = vmatprep.subr.bf16.mxu0 0
    %642 = vmatpush2.bf16.msra.mxu0 0
    %643 = vmatprep.subr.bf16.mxu0 0
    %644 = vmatpush2.bf16.msra.mxu0 0
    %645 = vmatprep.subr.bf16.mxu0 0
    %646 = vmatpush2.bf16.msra.mxu0 0
    %647 = vmatprep.subr.bf16.mxu0 0
    %648 = vmatpush2.bf16.msra.mxu0 0
    %649 = vmatprep.mubr.bf16.mxu0 0
    %650 = vmatmul.mubr.bf16.gmra.mxu0 %v615
    %v651 = vpop.f32.mrf.mxu0
    %v652 = vadd.f32 %v588, %v651
    %v653 = vpop.f32.mrf.mxu0
    %v654 = vpop.f32.mrf.mxu0
    %v655 = vpop.f32.mrf.mxu0
    %656 = vdwg.mxu0
    %v657 = vmax.f32 %v652, 0.0
    %v658 = vpack.c.bf16 %v657, %v657
    %v659 = vld [vmem:[%s11] sm:$0xf]
    %v660 = vld [vmem:[%s11 + $0x4] sm:$0xf]
    %v661 = vld [vmem:[%s11 + $0x8] sm:$0xf]
    %v662 = vld [vmem:[%s11 + $0xc] sm:$0xf]
    %v663 = vld [vmem:[%s12] sm:$0x1]
    %v665 = vlaneseq
    %v666 = vshrl.u32 %v665, 7
    %v667 = vsub.s32 0, %v666
    %v668 = vrot.slane %v663, %v667
    %v674 = vunpack.c.l.b16 %v659
    %v675 = vunpack.c.l.b16 %v660
    %v676 = vunpack.c.l.b16 %v661
    %v677 = vunpack.c.l.b16 %v662
    %v678 = vpack.c.b16 %v675, %v674
    %v679 = vpack.c.b16 %v677, %v676
    %v683 = vsel %vm318, %v658, 0
    %685 = vmatprep.subr.bf16.mxu0 0
    %686 = vmatpush1.bf16.msra.mxu0 0
    %687 = vmatprep.subr.bf16.mxu0 0
    %688 = vmatpush1.bf16.msra.mxu0 0
    %689 = vmatprep.subr.bf16.mxu0 0
    %690 = vmatpush1.bf16.msra.mxu0 0
    %691 = vmatprep.subr.bf16.mxu0 0
    %692 = vmatpush1.bf16.msra.mxu0 0
    %693 = vmatprep.subr.bf16.mxu0 0
    %694 = vmatpush1.bf16.msra.mxu0 0
    %695 = vmatprep.subr.bf16.mxu0 0
    %696 = vmatpush1.bf16.msra.mxu0 0
    %697 = vmatprep.subr.bf16.mxu0 0
    %698 = vmatpush1.bf16.msra.mxu0 %v679
    %699 = vmatprep.subr.bf16.mxu0 0
    %700 = vmatpush1.bf16.msra.mxu0 %v678
    %701 = vmatprep.subr.bf16.mxu0 0
    %702 = vmatpush2.bf16.msra.mxu0 0
    %703 = vmatprep.subr.bf16.mxu0 0
    %704 = vmatpush2.bf16.msra.mxu0 0
    %705 = vmatprep.subr.bf16.mxu0 0
    %706 = vmatpush2.bf16.msra.mxu0 0
    %707 = vmatprep.subr.bf16.mxu0 0
    %708 = vmatpush2.bf16.msra.mxu0 0
    %709 = vmatprep.subr.bf16.mxu0 0
    %710 = vmatpush2.bf16.msra.mxu0 0
    %711 = vmatprep.subr.bf16.mxu0 0
    %712 = vmatpush2.bf16.msra.mxu0 0
    %713 = vmatprep.subr.bf16.mxu0 0
    %714 = vmatpush2.bf16.msra.mxu0 0
    %715 = vmatprep.subr.bf16.mxu0 0
    %716 = vmatpush2.bf16.msra.mxu0 0
    %717 = vmatprep.mubr.bf16.mxu0 0
    %718 = vmatmul.mubr.bf16.gmra.mxu0 %v683
    %v719 = vpop.f32.mrf.mxu0
    %v720 = vadd.f32 %v668, %v719
    %v721 = vpop.f32.mrf.mxu0
    %v722 = vpop.f32.mrf.mxu0
    %v723 = vpop.f32.mrf.mxu0
    %724 = vdwg.mxu0
    %vm725 = vcmask 64512
    %726 = vst.msk [vmem:[#allocation2] sm:$0xff] %vm725, %v720
    // Predicated region
    $region54: #{tpu_custom_call.1} parent=1 // pred_check
      _
    $region55: #{tpu_custom_call.1} parent=1 // pred_check_branch
      %728 = sbr.rel (0) target = $region57
    $region56: #{tpu_custom_call.1} parent=1 // pred_region
      %s730 = ssub.s32 128, 128
      %731 = vsyncadd [#allocation3], %s730
      %s733 = sshll.u32 [#allocation2], 4
      %s734 = int_to_ptr.vmem [resolvable:$true] %s733
      %736 = dma.vmem_to_hbm [thread:$0]  %s734, 128, %s13, [#allocation3]
    $region57: #{tpu_custom_call.1} parent=1 // pred_fallthru
      _
    // Predicated region
    $region58: #{tpu_custom_call.1} parent=1 // pred_check
      _
    $region59: #{tpu_custom_call.1} parent=1 // pred_check_branch
      %738 = sbr.rel (0) target = $region61
    $region60: #{tpu_custom_call.1} parent=1 // pred_region
      %739 = dma.done [#allocation3], 128
    $region61: #{tpu_custom_call.1} parent=1 // pred_fallthru
      _
    %740 = vsyncpa [#allocation3], 1

</llo_original>
